<compile_context>
chip_gen: v5e
topology: v5e:2x2
jax: 0.10.0
libtpu: 0.0.40
codegen_flags: <defaults>
</compile_context>

<pallas_src>
import functools

import jax
import jax.numpy as jnp
from jax import lax
from jax.experimental import pallas as pl
from jax.experimental.pallas import tpu as pltpu


# --------------------------------------------------------------------------------------
# Fused multi-head-attention kernel (one batch element per grid step)
# --------------------------------------------------------------------------------------

def _mha_kernel(num_heads, dim_k, dim_v,
                q_ref, k_ref, v_ref,
                wq_ref, bq_ref, wk_ref, bk_ref, wv_ref, bv_ref,
                wo_ref, bo_ref,
                o_ref):
    f32 = jnp.float32
    bf16 = jnp.bfloat16

    q = q_ref[0].astype(bf16)          # (S, Din)
    k = k_ref[0].astype(bf16)
    v = v_ref[0].astype(bf16)

    inv_scale = 1.0 / (dim_k ** 0.5)

    # Fused projections for ALL heads: (S, Din) @ (Din, H*dk) — one wide MXU matmul each.
    # The 1/sqrt(dk) scale is folded into Q (equivalent to scaling the S x S scores).
    Q = (jnp.dot(q, wq_ref[...].astype(bf16), preferred_element_type=f32)
         + bq_ref[...]) * inv_scale
    K = jnp.dot(k, wk_ref[...].astype(bf16), preferred_element_type=f32) + bk_ref[...]
    V = jnp.dot(v, wv_ref[...].astype(bf16), preferred_element_type=f32) + bv_ref[...]

    Qb = Q.astype(bf16)
    Kb = K.astype(bf16)
    Vb = V.astype(bf16)

    # Contract the shared last dim of Q and K ('qd,kd->qk'): no explicit K transpose.
    qk_dims = (((1,), (1,)), ((), ()))

    ctx_heads = []
    for h in range(num_heads):                     # static unroll, H is small
        q_h = Qb[:, h * dim_k:(h + 1) * dim_k]
        k_h = Kb[:, h * dim_k:(h + 1) * dim_k]
        v_h = Vb[:, h * dim_v:(h + 1) * dim_v]

        s = lax.dot_general(q_h, k_h, qk_dims, preferred_element_type=f32)   # (S, S) f32
        s = s - jnp.max(s, axis=-1, keepdims=True)
        e = jnp.exp(s)
        p = e * pl.reciprocal(jnp.sum(e, axis=-1, keepdims=True), approx=True)

        ctx_heads.append(jnp.dot(p.astype(bf16), v_h, preferred_element_type=f32))

    ctx = jnp.concatenate(ctx_heads, axis=-1)       # (S, H*dv), stays in VMEM

    # Fused output projection: (S, H*dv) @ (H*dv, Din) + bias.
    out = jnp.dot(ctx.astype(bf16), wo_ref[...].astype(bf16),
                  preferred_element_type=f32) + bo_ref[...]
    o_ref[0] = out


# --------------------------------------------------------------------------------------
# pallas_call wrapper
# --------------------------------------------------------------------------------------

def _full_spec(shape):
    nd = len(shape)
    return pl.BlockSpec(shape, lambda b, _nd=nd: (0,) * _nd)


def multi_head_attention(params, query, key, value):
    B, S, din = query.shape
    H, dk, dv = params["num_heads"], params["dim_k"], params["dim_v"]
    kernel = functools.partial(_mha_kernel, H, dk, dv)

    act_spec = pl.BlockSpec((1, S, din), lambda b: (b, 0, 0))

    return pl.pallas_call(
        kernel,
        out_shape=jax.ShapeDtypeStruct((B, S, din), jnp.float32),
        grid=(B,),
        in_specs=[
            act_spec, act_spec, act_spec,
            _full_spec(params["wq"].shape), _full_spec(params["bq"].shape),
            _full_spec(params["wk"].shape), _full_spec(params["bk"].shape),
            _full_spec(params["wv"].shape), _full_spec(params["bv"].shape),
            _full_spec(params["wo"].shape), _full_spec(params["bo"].shape),
        ],
        out_specs=pl.BlockSpec((1, S, din), lambda b: (b, 0, 0)),
        compiler_params=pltpu.CompilerParams(
            dimension_semantics=("parallel",)),
    )(query, key, value,
      params["wq"], params["bq"], params["wk"], params["bk"],
      params["wv"], params["bv"], params["wo"], params["bo"])


# --------------------------------------------------------------------------------------
# Parameters (per-head weights stored stacked along the output dim)
# --------------------------------------------------------------------------------------

def init_params(key, num_heads, dim_in, dim_k, dim_v):
    def uniform(k, shape, fan_in):
        bound = 1.0 / (fan_in ** 0.5)        # PyTorch nn.Linear default init range
        return jax.random.uniform(k, shape, jnp.float32, -bound, bound)

    ks = jax.random.split(key, 8)
    return dict(
        num_heads=num_heads, dim_k=dim_k, dim_v=dim_v,
        wq=uniform(ks[0], (dim_in, num_heads * dim_k), dim_in),
        bq=uniform(ks[1], (1, num_heads * dim_k), dim_in),
        wk=uniform(ks[2], (dim_in, num_heads * dim_k), dim_in),
        bk=uniform(ks[3], (1, num_heads * dim_k), dim_in),
        wv=uniform(ks[4], (dim_in, num_heads * dim_v), dim_in),
        bv=uniform(ks[5], (1, num_heads * dim_v), dim_in),
        wo=uniform(ks[6], (num_heads * dim_v, dim_in), num_heads * dim_v),
        bo=uniform(ks[7], (1, dim_in), num_heads * dim_v),
    )


# --------------------------------------------------------------------------------------
# Pure-JAX f32 reference (mirrors the PyTorch forward exactly)
# --------------------------------------------------------------------------------------

def ref_forward(params, query, key, value):
    H, dk, dv = params["num_heads"], params["dim_k"], params["dim_v"]
    Q = query @ params["wq"] + params["bq"]
    K = key @ params["wk"] + params["bk"]
    V = value @ params["wv"] + params["bv"]
    outs = []
    for h in range(H):
        q_h = Q[..., h * dk:(h + 1) * dk]
        k_h = K[..., h * dk:(h + 1) * dk]
        v_h = V[..., h * dv:(h + 1) * dv]
        s = jnp.einsum("bqd,bkd->bqk", q_h, k_h) / (dk ** 0.5)
        outs.append(jnp.einsum("bqk,bkd->bqd", jax.nn.softmax(s, axis=-1), v_h))
    cat = jnp.concatenate(outs, axis=-1)
    return cat @ params["wo"] + params["bo"]


# --------------------------------------------------------------------------------------

if __name__ == "__main__":
    # Small shapes consistent with the module: batch=2, seq=8, dim_in=32, 4 heads, dk=dv=8.
    B, S, DIN, H, DK, DV = 2, 8, 32, 4, 8, 8

    root = jax.random.PRNGKey(0)
    kp, kq, kk, kv = jax.random.split(root, 4)
    params = init_params(kp, H, DIN, DK, DV)
    query = jax.random.normal(kq, (B, S, DIN), jnp.float32)
    key_ = jax.random.normal(kk, (B, S, DIN), jnp.float32)
    value = jax.random.normal(kv, (B, S, DIN), jnp.float32)

    out = jax.block_until_ready(multi_head_attention(params, query, key_, value))
    ref = jax.block_until_ready(ref_forward(params, query, key_, value))

    assert out.shape == (B, S, DIN)
    max_err = float(jnp.max(jnp.abs(out - ref)))
    # Tolerance accounts for bf16 matmul operands (f32 accumulation) + approx reciprocal.
    if max_err < 3e-2:
        print("KERNEL_OK")
    else:
        print(f"MISMATCH max_err={max_err}")
</pallas_src>

<mosaic_0001>
module attributes {stable_mosaic.version = 11 : i64} {
  func.func @_mha_kernel(%arg0: i32, %arg1: memref<1x8x32xf32, #tpu.memory_space<vmem>>, %arg2: memref<1x8x32xf32, #tpu.memory_space<vmem>>, %arg3: memref<1x8x32xf32, #tpu.memory_space<vmem>>, %arg4: memref<32x32xf32, #tpu.memory_space<vmem>>, %arg5: memref<1x32xf32, #tpu.memory_space<vmem>>, %arg6: memref<32x32xf32, #tpu.memory_space<vmem>>, %arg7: memref<1x32xf32, #tpu.memory_space<vmem>>, %arg8: memref<32x32xf32, #tpu.memory_space<vmem>>, %arg9: memref<1x32xf32, #tpu.memory_space<vmem>>, %arg10: memref<32x32xf32, #tpu.memory_space<vmem>>, %arg11: memref<1x32xf32, #tpu.memory_space<vmem>>, %arg12: memref<1x8x32xf32, #tpu.memory_space<vmem>>) attributes {dimension_semantics = [#tpu.dimension_semantics<parallel>], iteration_bounds = array<i64: 2>, scalar_prefetch = 0 : i64, scratch_operands = 0 : i64, tpu.core_type = #tpu.core_type<tc>, window_params = [{transform_indices = @transform_0, window_bounds = array<i64: 1, 8, 32>}, {transform_indices = @transform_1, window_bounds = array<i64: 1, 8, 32>}, {transform_indices = @transform_2, window_bounds = array<i64: 1, 8, 32>}, {pipeline_mode = #tpu.pipeline_mode<synchronous>, transform_indices = @transform_3, window_bounds = array<i64: 32, 32>}, {pipeline_mode = #tpu.pipeline_mode<synchronous>, transform_indices = @transform_4, window_bounds = array<i64: 1, 32>}, {pipeline_mode = #tpu.pipeline_mode<synchronous>, transform_indices = @transform_5, window_bounds = array<i64: 32, 32>}, {pipeline_mode = #tpu.pipeline_mode<synchronous>, transform_indices = @transform_6, window_bounds = array<i64: 1, 32>}, {pipeline_mode = #tpu.pipeline_mode<synchronous>, transform_indices = @transform_7, window_bounds = array<i64: 32, 32>}, {pipeline_mode = #tpu.pipeline_mode<synchronous>, transform_indices = @transform_8, window_bounds = array<i64: 1, 32>}, {pipeline_mode = #tpu.pipeline_mode<synchronous>, transform_indices = @transform_9, window_bounds = array<i64: 32, 32>}, {pipeline_mode = #tpu.pipeline_mode<synchronous>, transform_indices = @transform_10, window_bounds = array<i64: 1, 32>}, {transform_indices = @transform_11, window_bounds = array<i64: 1, 8, 32>}]} {
    %c0 = arith.constant 0 : index
    %c0_0 = arith.constant 0 : index
    %c0_1 = arith.constant 0 : index
    %0 = vector.load %arg1[%c0, %c0_0, %c0_1] : memref<1x8x32xf32, #tpu.memory_space<vmem>>, vector<1x8x32xf32>
    %1 = vector.shape_cast %0 : vector<1x8x32xf32> to vector<8x32xf32>
    %2 = arith.truncf %1 : vector<8x32xf32> to vector<8x32xbf16>
    %c0_2 = arith.constant 0 : index
    %c0_3 = arith.constant 0 : index
    %c0_4 = arith.constant 0 : index
    %3 = vector.load %arg2[%c0_2, %c0_3, %c0_4] : memref<1x8x32xf32, #tpu.memory_space<vmem>>, vector<1x8x32xf32>
    %4 = vector.shape_cast %3 : vector<1x8x32xf32> to vector<8x32xf32>
    %5 = arith.truncf %4 : vector<8x32xf32> to vector<8x32xbf16>
    %c0_5 = arith.constant 0 : index
    %c0_6 = arith.constant 0 : index
    %c0_7 = arith.constant 0 : index
    %6 = vector.load %arg3[%c0_5, %c0_6, %c0_7] : memref<1x8x32xf32, #tpu.memory_space<vmem>>, vector<1x8x32xf32>
    %7 = vector.shape_cast %6 : vector<1x8x32xf32> to vector<8x32xf32>
    %8 = arith.truncf %7 : vector<8x32xf32> to vector<8x32xbf16>
    %c0_8 = arith.constant 0 : index
    %c0_9 = arith.constant 0 : index
    %9 = vector.load %arg4[%c0_8, %c0_9] : memref<32x32xf32, #tpu.memory_space<vmem>>, vector<32x32xf32>
    %10 = arith.truncf %9 : vector<32x32xf32> to vector<32x32xbf16>
    %cst = arith.constant dense<0.000000e+00> : vector<8x32xf32>
    %11 = tpu.matmul %2, %10, %cst {dimension_numbers = #tpu.dot_dimension_numbers<[1], [0], [0], [1], [0, 0, 1, 1], [], []>} : vector<8x32xbf16>, vector<32x32xbf16>, vector<8x32xf32> -> vector<8x32xf32>
    %c0_10 = arith.constant 0 : index
    %c0_11 = arith.constant 0 : index
    %12 = vector.load %arg5[%c0_10, %c0_11] : memref<1x32xf32, #tpu.memory_space<vmem>>, vector<1x32xf32>
    %13 = vector.broadcast %12 : vector<1x32xf32> to vector<8x32xf32>
    %14 = arith.addf %11, %13 : vector<8x32xf32>
    %cst_12 = arith.constant 0.353553385 : f32
    %15 = vector.broadcast %cst_12 : f32 to vector<8x32xf32>
    %16 = arith.mulf %14, %15 : vector<8x32xf32>
    %c0_13 = arith.constant 0 : index
    %c0_14 = arith.constant 0 : index
    %17 = vector.load %arg6[%c0_13, %c0_14] : memref<32x32xf32, #tpu.memory_space<vmem>>, vector<32x32xf32>
    %18 = arith.truncf %17 : vector<32x32xf32> to vector<32x32xbf16>
    %cst_15 = arith.constant dense<0.000000e+00> : vector<8x32xf32>
    %19 = tpu.matmul %5, %18, %cst_15 {dimension_numbers = #tpu.dot_dimension_numbers<[1], [0], [0], [1], [0, 0, 1, 1], [], []>} : vector<8x32xbf16>, vector<32x32xbf16>, vector<8x32xf32> -> vector<8x32xf32>
    %c0_16 = arith.constant 0 : index
    %c0_17 = arith.constant 0 : index
    %20 = vector.load %arg7[%c0_16, %c0_17] : memref<1x32xf32, #tpu.memory_space<vmem>>, vector<1x32xf32>
    %21 = vector.broadcast %20 : vector<1x32xf32> to vector<8x32xf32>
    %22 = arith.addf %19, %21 : vector<8x32xf32>
    %c0_18 = arith.constant 0 : index
    %c0_19 = arith.constant 0 : index
    %23 = vector.load %arg8[%c0_18, %c0_19] : memref<32x32xf32, #tpu.memory_space<vmem>>, vector<32x32xf32>
    %24 = arith.truncf %23 : vector<32x32xf32> to vector<32x32xbf16>
    %cst_20 = arith.constant dense<0.000000e+00> : vector<8x32xf32>
    %25 = tpu.matmul %8, %24, %cst_20 {dimension_numbers = #tpu.dot_dimension_numbers<[1], [0], [0], [1], [0, 0, 1, 1], [], []>} : vector<8x32xbf16>, vector<32x32xbf16>, vector<8x32xf32> -> vector<8x32xf32>
    %c0_21 = arith.constant 0 : index
    %c0_22 = arith.constant 0 : index
    %26 = vector.load %arg9[%c0_21, %c0_22] : memref<1x32xf32, #tpu.memory_space<vmem>>, vector<1x32xf32>
    %27 = vector.broadcast %26 : vector<1x32xf32> to vector<8x32xf32>
    %28 = arith.addf %25, %27 : vector<8x32xf32>
    %29 = arith.truncf %16 : vector<8x32xf32> to vector<8x32xbf16>
    %30 = arith.truncf %22 : vector<8x32xf32> to vector<8x32xbf16>
    %31 = arith.truncf %28 : vector<8x32xf32> to vector<8x32xbf16>
    %32 = vector.extract_strided_slice %29 {offsets = [0, 0], sizes = [8, 8], strides = [1, 1]} : vector<8x32xbf16> to vector<8x8xbf16>
    %33 = vector.extract_strided_slice %30 {offsets = [0, 0], sizes = [8, 8], strides = [1, 1]} : vector<8x32xbf16> to vector<8x8xbf16>
    %34 = vector.extract_strided_slice %31 {offsets = [0, 0], sizes = [8, 8], strides = [1, 1]} : vector<8x32xbf16> to vector<8x8xbf16>
    %cst_23 = arith.constant dense<0.000000e+00> : vector<8x8xf32>
    %35 = tpu.matmul %32, %33, %cst_23 {dimension_numbers = #tpu.dot_dimension_numbers<[1], [1], [0], [0], [0, 0, 1, 0], [], []>} : vector<8x8xbf16>, vector<8x8xbf16>, vector<8x8xf32> -> vector<8x8xf32>
    %cst_24 = arith.constant dense<0xFF800000> : vector<8xf32>
    %36 = vector.multi_reduction <maximumf>, %35, %cst_24 [1] : vector<8x8xf32> to vector<8xf32>
    %37 = vector.shape_cast %36 : vector<8xf32> to vector<8x1xf32>
    %38 = vector.broadcast %37 : vector<8x1xf32> to vector<8x8xf32>
    %39 = arith.subf %35, %38 : vector<8x8xf32>
    %40 = math.exp %39 : vector<8x8xf32>
    %cst_25 = arith.constant dense<0.000000e+00> : vector<8xf32>
    %41 = vector.multi_reduction <add>, %40, %cst_25 [1] : vector<8x8xf32> to vector<8xf32>
    %42 = vector.shape_cast %41 : vector<8xf32> to vector<8x1xf32>
    %43 = tpu.reciprocal %42 {approx = true} : vector<8x1xf32> -> vector<8x1xf32>
    %44 = vector.broadcast %43 : vector<8x1xf32> to vector<8x8xf32>
    %45 = arith.mulf %40, %44 : vector<8x8xf32>
    %46 = arith.truncf %45 : vector<8x8xf32> to vector<8x8xbf16>
    %cst_26 = arith.constant dense<0.000000e+00> : vector<8x8xf32>
    %47 = tpu.matmul %46, %34, %cst_26 {dimension_numbers = #tpu.dot_dimension_numbers<[1], [0], [0], [1], [0, 0, 1, 1], [], []>} : vector<8x8xbf16>, vector<8x8xbf16>, vector<8x8xf32> -> vector<8x8xf32>
    %48 = vector.extract_strided_slice %29 {offsets = [0, 8], sizes = [8, 8], strides = [1, 1]} : vector<8x32xbf16> to vector<8x8xbf16>
    %49 = vector.extract_strided_slice %30 {offsets = [0, 8], sizes = [8, 8], strides = [1, 1]} : vector<8x32xbf16> to vector<8x8xbf16>
    %50 = vector.extract_strided_slice %31 {offsets = [0, 8], sizes = [8, 8], strides = [1, 1]} : vector<8x32xbf16> to vector<8x8xbf16>
    %cst_27 = arith.constant dense<0.000000e+00> : vector<8x8xf32>
    %51 = tpu.matmul %48, %49, %cst_27 {dimension_numbers = #tpu.dot_dimension_numbers<[1], [1], [0], [0], [0, 0, 1, 0], [], []>} : vector<8x8xbf16>, vector<8x8xbf16>, vector<8x8xf32> -> vector<8x8xf32>
    %cst_28 = arith.constant dense<0xFF800000> : vector<8xf32>
    %52 = vector.multi_reduction <maximumf>, %51, %cst_28 [1] : vector<8x8xf32> to vector<8xf32>
    %53 = vector.shape_cast %52 : vector<8xf32> to vector<8x1xf32>
    %54 = vector.broadcast %53 : vector<8x1xf32> to vector<8x8xf32>
    %55 = arith.subf %51, %54 : vector<8x8xf32>
    %56 = math.exp %55 : vector<8x8xf32>
    %cst_29 = arith.constant dense<0.000000e+00> : vector<8xf32>
    %57 = vector.multi_reduction <add>, %56, %cst_29 [1] : vector<8x8xf32> to vector<8xf32>
    %58 = vector.shape_cast %57 : vector<8xf32> to vector<8x1xf32>
    %59 = tpu.reciprocal %58 {approx = true} : vector<8x1xf32> -> vector<8x1xf32>
    %60 = vector.broadcast %59 : vector<8x1xf32> to vector<8x8xf32>
    %61 = arith.mulf %56, %60 : vector<8x8xf32>
    %62 = arith.truncf %61 : vector<8x8xf32> to vector<8x8xbf16>
    %cst_30 = arith.constant dense<0.000000e+00> : vector<8x8xf32>
    %63 = tpu.matmul %62, %50, %cst_30 {dimension_numbers = #tpu.dot_dimension_numbers<[1], [0], [0], [1], [0, 0, 1, 1], [], []>} : vector<8x8xbf16>, vector<8x8xbf16>, vector<8x8xf32> -> vector<8x8xf32>
    %64 = vector.extract_strided_slice %29 {offsets = [0, 16], sizes = [8, 8], strides = [1, 1]} : vector<8x32xbf16> to vector<8x8xbf16>
    %65 = vector.extract_strided_slice %30 {offsets = [0, 16], sizes = [8, 8], strides = [1, 1]} : vector<8x32xbf16> to vector<8x8xbf16>
    %66 = vector.extract_strided_slice %31 {offsets = [0, 16], sizes = [8, 8], strides = [1, 1]} : vector<8x32xbf16> to vector<8x8xbf16>
    %cst_31 = arith.constant dense<0.000000e+00> : vector<8x8xf32>
    %67 = tpu.matmul %64, %65, %cst_31 {dimension_numbers = #tpu.dot_dimension_numbers<[1], [1], [0], [0], [0, 0, 1, 0], [], []>} : vector<8x8xbf16>, vector<8x8xbf16>, vector<8x8xf32> -> vector<8x8xf32>
    %cst_32 = arith.constant dense<0xFF800000> : vector<8xf32>
    %68 = vector.multi_reduction <maximumf>, %67, %cst_32 [1] : vector<8x8xf32> to vector<8xf32>
    %69 = vector.shape_cast %68 : vector<8xf32> to vector<8x1xf32>
    %70 = vector.broadcast %69 : vector<8x1xf32> to vector<8x8xf32>
    %71 = arith.subf %67, %70 : vector<8x8xf32>
    %72 = math.exp %71 : vector<8x8xf32>
    %cst_33 = arith.constant dense<0.000000e+00> : vector<8xf32>
    %73 = vector.multi_reduction <add>, %72, %cst_33 [1] : vector<8x8xf32> to vector<8xf32>
    %74 = vector.shape_cast %73 : vector<8xf32> to vector<8x1xf32>
    %75 = tpu.reciprocal %74 {approx = true} : vector<8x1xf32> -> vector<8x1xf32>
    %76 = vector.broadcast %75 : vector<8x1xf32> to vector<8x8xf32>
    %77 = arith.mulf %72, %76 : vector<8x8xf32>
    %78 = arith.truncf %77 : vector<8x8xf32> to vector<8x8xbf16>
    %cst_34 = arith.constant dense<0.000000e+00> : vector<8x8xf32>
    %79 = tpu.matmul %78, %66, %cst_34 {dimension_numbers = #tpu.dot_dimension_numbers<[1], [0], [0], [1], [0, 0, 1, 1], [], []>} : vector<8x8xbf16>, vector<8x8xbf16>, vector<8x8xf32> -> vector<8x8xf32>
    %80 = vector.extract_strided_slice %29 {offsets = [0, 24], sizes = [8, 8], strides = [1, 1]} : vector<8x32xbf16> to vector<8x8xbf16>
    %81 = vector.extract_strided_slice %30 {offsets = [0, 24], sizes = [8, 8], strides = [1, 1]} : vector<8x32xbf16> to vector<8x8xbf16>
    %82 = vector.extract_strided_slice %31 {offsets = [0, 24], sizes = [8, 8], strides = [1, 1]} : vector<8x32xbf16> to vector<8x8xbf16>
    %cst_35 = arith.constant dense<0.000000e+00> : vector<8x8xf32>
    %83 = tpu.matmul %80, %81, %cst_35 {dimension_numbers = #tpu.dot_dimension_numbers<[1], [1], [0], [0], [0, 0, 1, 0], [], []>} : vector<8x8xbf16>, vector<8x8xbf16>, vector<8x8xf32> -> vector<8x8xf32>
    %cst_36 = arith.constant dense<0xFF800000> : vector<8xf32>
    %84 = vector.multi_reduction <maximumf>, %83, %cst_36 [1] : vector<8x8xf32> to vector<8xf32>
    %85 = vector.shape_cast %84 : vector<8xf32> to vector<8x1xf32>
    %86 = vector.broadcast %85 : vector<8x1xf32> to vector<8x8xf32>
    %87 = arith.subf %83, %86 : vector<8x8xf32>
    %88 = math.exp %87 : vector<8x8xf32>
    %cst_37 = arith.constant dense<0.000000e+00> : vector<8xf32>
    %89 = vector.multi_reduction <add>, %88, %cst_37 [1] : vector<8x8xf32> to vector<8xf32>
    %90 = vector.shape_cast %89 : vector<8xf32> to vector<8x1xf32>
    %91 = tpu.reciprocal %90 {approx = true} : vector<8x1xf32> -> vector<8x1xf32>
    %92 = vector.broadcast %91 : vector<8x1xf32> to vector<8x8xf32>
    %93 = arith.mulf %88, %92 : vector<8x8xf32>
    %94 = arith.truncf %93 : vector<8x8xf32> to vector<8x8xbf16>
    %cst_38 = arith.constant dense<0.000000e+00> : vector<8x8xf32>
    %95 = tpu.matmul %94, %82, %cst_38 {dimension_numbers = #tpu.dot_dimension_numbers<[1], [0], [0], [1], [0, 0, 1, 1], [], []>} : vector<8x8xbf16>, vector<8x8xbf16>, vector<8x8xf32> -> vector<8x8xf32>
    %96 = tpu.concatenate %47, %63, %79, %95 in 1 : vector<8x8xf32>, vector<8x8xf32>, vector<8x8xf32>, vector<8x8xf32> -> vector<8x32xf32>
    %97 = arith.truncf %96 : vector<8x32xf32> to vector<8x32xbf16>
    %c0_39 = arith.constant 0 : index
    %c0_40 = arith.constant 0 : index
    %98 = vector.load %arg10[%c0_39, %c0_40] : memref<32x32xf32, #tpu.memory_space<vmem>>, vector<32x32xf32>
    %99 = arith.truncf %98 : vector<32x32xf32> to vector<32x32xbf16>
    %cst_41 = arith.constant dense<0.000000e+00> : vector<8x32xf32>
    %100 = tpu.matmul %97, %99, %cst_41 {dimension_numbers = #tpu.dot_dimension_numbers<[1], [0], [0], [1], [0, 0, 1, 1], [], []>} : vector<8x32xbf16>, vector<32x32xbf16>, vector<8x32xf32> -> vector<8x32xf32>
    %c0_42 = arith.constant 0 : index
    %c0_43 = arith.constant 0 : index
    %101 = vector.load %arg11[%c0_42, %c0_43] : memref<1x32xf32, #tpu.memory_space<vmem>>, vector<1x32xf32>
    %102 = vector.broadcast %101 : vector<1x32xf32> to vector<8x32xf32>
    %103 = arith.addf %100, %102 : vector<8x32xf32>
    %c0_44 = arith.constant 0 : index
    %c0_45 = arith.constant 0 : index
    %c0_46 = arith.constant 0 : index
    %104 = vector.load %arg12[%c0_44, %c0_45, %c0_46] : memref<1x8x32xf32, #tpu.memory_space<vmem>>, vector<1x8x32xf32>
    %105 = vector.shape_cast %104 : vector<1x8x32xf32> to vector<8x32xf32>
    %106 = vector.shape_cast %103 : vector<8x32xf32> to vector<1x8x32xf32>
    tpu.vector_store %arg12[%c0_44, %c0_45, %c0_46], %106 {strides = array<i32>} : memref<1x8x32xf32, #tpu.memory_space<vmem>>, vector<1x8x32xf32>,
    return
  }
  func.func @transform_0(%arg0: i32) -> (i32, i32, i32) {
    %c0_i32 = arith.constant 0 : i32
    %c0_i32_0 = arith.constant 0 : i32
    %c0_i32_1 = arith.constant 0 : i32
    return %arg0, %c0_i32, %c0_i32_0 : i32, i32, i32
  }
  func.func @transform_1(%arg0: i32) -> (i32, i32, i32) {
    %c0_i32 = arith.constant 0 : i32
    %c0_i32_0 = arith.constant 0 : i32
    %c0_i32_1 = arith.constant 0 : i32
    return %arg0, %c0_i32, %c0_i32_0 : i32, i32, i32
  }
  func.func @transform_2(%arg0: i32) -> (i32, i32, i32) {
    %c0_i32 = arith.constant 0 : i32
    %c0_i32_0 = arith.constant 0 : i32
    %c0_i32_1 = arith.constant 0 : i32
    return %arg0, %c0_i32, %c0_i32_0 : i32, i32, i32
  }
  func.func @transform_3(%arg0: i32) -> (i32, i32) {
    %c0_i32 = arith.constant 0 : i32
    %c0_i32_0 = arith.constant 0 : i32
    %c0_i32_1 = arith.constant 0 : i32
    return %c0_i32, %c0_i32_0 : i32, i32
  }
  func.func @transform_4(%arg0: i32) -> (i32, i32) {
    %c0_i32 = arith.constant 0 : i32
    %c0_i32_0 = arith.constant 0 : i32
    %c0_i32_1 = arith.constant 0 : i32
    return %c0_i32, %c0_i32_0 : i32, i32
  }
  func.func @transform_5(%arg0: i32) -> (i32, i32) {
    %c0_i32 = arith.constant 0 : i32
    %c0_i32_0 = arith.constant 0 : i32
    %c0_i32_1 = arith.constant 0 : i32
    return %c0_i32, %c0_i32_0 : i32, i32
  }
  func.func @transform_6(%arg0: i32) -> (i32, i32) {
    %c0_i32 = arith.constant 0 : i32
    %c0_i32_0 = arith.constant 0 : i32
    %c0_i32_1 = arith.constant 0 : i32
    return %c0_i32, %c0_i32_0 : i32, i32
  }
  func.func @transform_7(%arg0: i32) -> (i32, i32) {
    %c0_i32 = arith.constant 0 : i32
    %c0_i32_0 = arith.constant 0 : i32
    %c0_i32_1 = arith.constant 0 : i32
    return %c0_i32, %c0_i32_0 : i32, i32
  }
  func.func @transform_8(%arg0: i32) -> (i32, i32) {
    %c0_i32 = arith.constant 0 : i32
    %c0_i32_0 = arith.constant 0 : i32
    %c0_i32_1 = arith.constant 0 : i32
    return %c0_i32, %c0_i32_0 : i32, i32
  }
  func.func @transform_9(%arg0: i32) -> (i32, i32) {
    %c0_i32 = arith.constant 0 : i32
    %c0_i32_0 = arith.constant 0 : i32
    %c0_i32_1 = arith.constant 0 : i32
    return %c0_i32, %c0_i32_0 : i32, i32
  }
  func.func @transform_10(%arg0: i32) -> (i32, i32) {
    %c0_i32 = arith.constant 0 : i32
    %c0_i32_0 = arith.constant 0 : i32
    %c0_i32_1 = arith.constant 0 : i32
    return %c0_i32, %c0_i32_0 : i32, i32
  }
  func.func @transform_11(%arg0: i32) -> (i32, i32, i32) {
    %c0_i32 = arith.constant 0 : i32
    %c0_i32_0 = arith.constant 0 : i32
    %c0_i32_1 = arith.constant 0 : i32
    return %arg0, %c0_i32, %c0_i32_0 : i32, i32, i32
  }
}

</mosaic_0001>

<llo_original>
// kernel: tpu_custom_call.1
$region0: #{tpu_custom_call.1}
  #allocation0 [shape = 'u32[]', space=smem, size = 0x4, offset = 0x4, fixed_abs, tag = 'smem constant byte address 0x4 - core index']
  #allocation1 [shape = 'u32[72,128]{1,0:T(1,128)}', space=vmem, size = 0x9000, scoped, tag = 'internal scratch']
  %s0 = inlined_call_operand.hbm [shape: f32[2,8,32], index: 0, kind: input, shape index: {}]
  %s1 = inlined_call_operand.hbm [shape: f32[2,8,32], index: 1, kind: input, shape index: {}]
  %s2 = inlined_call_operand.hbm [shape: f32[2,8,32], index: 2, kind: input, shape index: {}]
  %s3 = inlined_call_operand.hbm [shape: f32[32,32], index: 3, kind: input, shape index: {}]
  %s4 = inlined_call_operand.vmem [shape: f32[1,32], index: 4, kind: input, shape index: {}]
  %s5 = inlined_call_operand.hbm [shape: f32[32,32], index: 5, kind: input, shape index: {}]
  %s6 = inlined_call_operand.vmem [shape: f32[1,32], index: 6, kind: input, shape index: {}]
  %s7 = inlined_call_operand.hbm [shape: f32[32,32], index: 7, kind: input, shape index: {}]
  %s8 = inlined_call_operand.vmem [shape: f32[1,32], index: 8, kind: input, shape index: {}]
  %s9 = inlined_call_operand.hbm [shape: f32[32,32], index: 9, kind: input, shape index: {}]
  %s10 = inlined_call_operand.vmem [shape: f32[1,32], index: 10, kind: input, shape index: {}]
  %s11 = inlined_call_operand.hbm [shape: f32[2,8,32], index: 11, kind: output, shape index: {}]
  %s12 = sld [smem:[#allocation0]]
  $region105: #{tpu_custom_call.1} parent=0
    _
  %s14 = ssub.s32 1, %s12
  %s15 = scalar_select 0, %s14, %s12
  $region1: #{tpu_custom_call.1} parent=0
    #allocation2 [shape = 'u8[8192]{0}', space=vmem, size = 0x2000, scoped, tag = 'input window, operand 0']
    #allocation3 [shape = 's32[2]{0}', space=sflag, size = 0x8, scoped, tag = 'scoped memory for tpu_custom_call.1']
    #allocation4 [shape = 's32[2]{0}', space=sflag, size = 0x8, scoped, tag = 'scoped memory for tpu_custom_call.1']
    #allocation5 [shape = 'u8[8192]{0}', space=vmem, size = 0x2000, scoped, tag = 'input window, operand 1']
    #allocation6 [shape = 's32[2]{0}', space=sflag, size = 0x8, scoped, tag = 'scoped memory for tpu_custom_call.1']
    #allocation7 [shape = 'u8[8192]{0}', space=vmem, size = 0x2000, scoped, tag = 'input window, operand 2']
    #allocation8 [shape = 'u8[16384]{0}', space=vmem, size = 0x4000, scoped, tag = 'input window, operand 3, single buffered']
    #allocation9 [shape = 's32[1]{0}', space=sflag, size = 0x4, scoped, tag = 'scoped memory for tpu_custom_call.1']
    #allocation10 [shape = 'u8[16384]{0}', space=vmem, size = 0x4000, scoped, tag = 'input window, operand 5, single buffered']
    #allocation11 [shape = 'u8[16384]{0}', space=vmem, size = 0x4000, scoped, tag = 'input window, operand 7, single buffered']
    #allocation12 [shape = 's32[1]{0}', space=sflag, size = 0x4, scoped, tag = 'scoped memory for tpu_custom_call.1']
    #allocation13 [shape = 'u8[16384]{0}', space=vmem, size = 0x4000, scoped, tag = 'input window, operand 9, single buffered']
    #allocation14 [shape = 'u8[8192]{0}', space=vmem, size = 0x2000, scoped, tag = 'output window, operand 0']
    %16 = vsyncpa [#allocation3], 0
    %s17 = scalar_lea.sflag [#allocation3], 1
    %18 = vsyncpa %s17, 0
    %19 = vsyncpa [#allocation6], 0
    %s20 = scalar_lea.sflag [#allocation6], 1
    %21 = vsyncpa %s20, 0
    %22 = vsyncpa [#allocation9], 0
    %23 = vsyncpa [#allocation12], 0
    %24 = vsyncpa [#allocation4], 0
    %s25 = scalar_lea.sflag [#allocation4], 1
    %26 = vsyncpa %s25, 0
    loop: start=0, step=1, limit=4
    $region2: #{tpu_custom_call.1} parent=1 // loop_pre_header
      _
    $region3: #{tpu_custom_call.1} parent=1 // loop_header
      %s28 = sphi 0, %s32
      %p29 = scmp.ge.s32.totalorder %s28, 4
      %s38 = sphi 0, %s40
      %s41 = sphi 0, %s38
      %s42 = sphi 0, %s41
      %s58 = sphi 0, %s42
      %s64 = sphi 0, %s66
      %s67 = sphi 0, %s64
      %s68 = sphi 0, %s67
      %s84 = sphi 0, %s68
      %s90 = sphi 0, %s92
      %s93 = sphi 0, %s90
      %s94 = sphi 0, %s93
      %s110 = sphi 0, %s94
      %s114 = sphi 0, %s114
      %s116 = sphi 0, %s114
      %s117 = sphi 0, %s116
      %s131 = sphi 0, %s117
      %s135 = sphi 0, %s135
      %s137 = sphi 0, %s135
      %s138 = sphi 0, %s137
      %s152 = sphi 0, %s138
      %s156 = sphi 0, %s156
      %s158 = sphi 0, %s156
      %s159 = sphi 0, %s158
      %s173 = sphi 0, %s159
      %s177 = sphi 0, %s177
      %s179 = sphi 0, %s177
      %s180 = sphi 0, %s179
      %s194 = sphi 0, %s180
      %s198 = sphi 0, %s198
      %s200 = sphi 0, %s198
      %s201 = sphi 0, %s200
      %s215 = sphi 0, %s201
      %s219 = sphi 0, %s219
      %s221 = sphi 0, %s219
      %s222 = sphi 0, %s221
      %s236 = sphi 0, %s222
      %s240 = sphi 0, %s240
      %s242 = sphi 0, %s240
      %s243 = sphi 0, %s242
      %s257 = sphi 0, %s243
      %s261 = sphi 0, %s261
      %s263 = sphi 0, %s261
      %s264 = sphi 0, %s263
      %s278 = sphi 0, %s264
      %s284 = sphi 0, %s286
      %s287 = sphi 0, %s284
      %s288 = sphi 0, %s287
      %s304 = sphi 0, %s288
    $region4: #{tpu_custom_call.1} parent=1 // loop_header_branch
      %31 = sbr.rel (%p29) target = $region8
    $region5: #{tpu_custom_call.1} parent=1 // loop_body
      %s33 = ssub.s32 %s28, 1
      %s34 = ssub.s32 %s28, 2
      %s35 = sadd.s32 %s28, 1
      %s36 = ssub.s32 %s28, %s35
      %p37 = scmp.eq.s32.totalorder %s36, 0
      %s39 = sadd.s32 %s38, 1
      %s40 = scalar_select %p37, %s38, %s39
      %p43 = pneg %p37
      %p44 = scmp.eq.s32.totalorder %s28, 1
      %p45 = por %p43, %p44
      %p46 = scmp.ne.s32.totalorder %s38, %s41
      %p47 = scmp.eq.s32.totalorder %s28, 0
      %p48 = por %p46, %p47
      %p49 = scmp.ne.s32.totalorder %s38, %s41
      %p50 = scmp.eq.s32.totalorder %s33, 1
      %p51 = por %p49, %p50
      %p52 = scmp.ne.s32.totalorder %s41, %s42
      %p53 = scmp.eq.s32.totalorder %s33, 0
      %p54 = por %p52, %p53
      %p55 = scmp.ne.s32.totalorder %s41, %s42
      %p56 = scmp.eq.s32.totalorder %s34, 1
      %p57 = por %p55, %p56
      %p59 = scmp.ne.s32.totalorder %s42, %s58
      %p60 = scmp.eq.s32.totalorder %s34, 0
      %p61 = por %p59, %p60
      %s62 = ssub.s32 %s28, %s35
      %p63 = scmp.eq.s32.totalorder %s62, 0
      %s65 = sadd.s32 %s64, 1
      %s66 = scalar_select %p63, %s64, %s65
      %p69 = pneg %p63
      %p70 = scmp.eq.s32.totalorder %s28, 1
      %p71 = por %p69, %p70
      %p72 = scmp.ne.s32.totalorder %s64, %s67
      %p73 = scmp.eq.s32.totalorder %s28, 0
      %p74 = por %p72, %p73
      %p75 = scmp.ne.s32.totalorder %s64, %s67
      %p76 = scmp.eq.s32.totalorder %s33, 1
      %p77 = por %p75, %p76
      %p78 = scmp.ne.s32.totalorder %s67, %s68
      %p79 = scmp.eq.s32.totalorder %s33, 0
      %p80 = por %p78, %p79
      %p81 = scmp.ne.s32.totalorder %s67, %s68
      %p82 = scmp.eq.s32.totalorder %s34, 1
      %p83 = por %p81, %p82
      %p85 = scmp.ne.s32.totalorder %s68, %s84
      %p86 = scmp.eq.s32.totalorder %s34, 0
      %p87 = por %p85, %p86
      %s88 = ssub.s32 %s28, %s35
      %p89 = scmp.eq.s32.totalorder %s88, 0
      %s91 = sadd.s32 %s90, 1
      %s92 = scalar_select %p89, %s90, %s91
      %p95 = pneg %p89
      %p96 = scmp.eq.s32.totalorder %s28, 1
      %p97 = por %p95, %p96
      %p98 = scmp.ne.s32.totalorder %s90, %s93
      %p99 = scmp.eq.s32.totalorder %s28, 0
      %p100 = por %p98, %p99
      %p101 = scmp.ne.s32.totalorder %s90, %s93
      %p102 = scmp.eq.s32.totalorder %s33, 1
      %p103 = por %p101, %p102
      %p104 = scmp.ne.s32.totalorder %s93, %s94
      %p105 = scmp.eq.s32.totalorder %s33, 0
      %p106 = por %p104, %p105
      %p107 = scmp.ne.s32.totalorder %s93, %s94
      %p108 = scmp.eq.s32.totalorder %s34, 1
      %p109 = por %p107, %p108
      %p111 = scmp.ne.s32.totalorder %s94, %s110
      %p112 = scmp.eq.s32.totalorder %s34, 0
      %p113 = por %p111, %p112
      %s115 = sadd.s32 %s114, 1
      %p118 = scmp.eq.s32.totalorder %s28, 1
      %p119 = scmp.ne.s32.totalorder %s114, %s116
      %p120 = scmp.eq.s32.totalorder %s28, 0
      %p121 = por %p119, %p120
      %p122 = scmp.ne.s32.totalorder %s114, %s116
      %p123 = scmp.eq.s32.totalorder %s33, 1
      %p124 = por %p122, %p123
      %p125 = scmp.ne.s32.totalorder %s116, %s117
      %p126 = scmp.eq.s32.totalorder %s33, 0
      %p127 = por %p125, %p126
      %p128 = scmp.ne.s32.totalorder %s116, %s117
      %p129 = scmp.eq.s32.totalorder %s34, 1
      %p130 = por %p128, %p129
      %p132 = scmp.ne.s32.totalorder %s117, %s131
      %p133 = scmp.eq.s32.totalorder %s34, 0
      %p134 = por %p132, %p133
      %s136 = sadd.s32 %s135, 1
      %p139 = scmp.eq.s32.totalorder %s28, 1
      %p140 = scmp.ne.s32.totalorder %s135, %s137
      %p141 = scmp.eq.s32.totalorder %s28, 0
      %p142 = por %p140, %p141
      %p143 = scmp.ne.s32.totalorder %s135, %s137
      %p144 = scmp.eq.s32.totalorder %s33, 1
      %p145 = por %p143, %p144
      %p146 = scmp.ne.s32.totalorder %s137, %s138
      %p147 = scmp.eq.s32.totalorder %s33, 0
      %p148 = por %p146, %p147
      %p149 = scmp.ne.s32.totalorder %s137, %s138
      %p150 = scmp.eq.s32.totalorder %s34, 1
      %p151 = por %p149, %p150
      %p153 = scmp.ne.s32.totalorder %s138, %s152
      %p154 = scmp.eq.s32.totalorder %s34, 0
      %p155 = por %p153, %p154
      %s157 = sadd.s32 %s156, 1
      %p160 = scmp.eq.s32.totalorder %s28, 1
      %p161 = scmp.ne.s32.totalorder %s156, %s158
      %p162 = scmp.eq.s32.totalorder %s28, 0
      %p163 = por %p161, %p162
      %p164 = scmp.ne.s32.totalorder %s156, %s158
      %p165 = scmp.eq.s32.totalorder %s33, 1
      %p166 = por %p164, %p165
      %p167 = scmp.ne.s32.totalorder %s158, %s159
      %p168 = scmp.eq.s32.totalorder %s33, 0
      %p169 = por %p167, %p168
      %p170 = scmp.ne.s32.totalorder %s158, %s159
      %p171 = scmp.eq.s32.totalorder %s34, 1
      %p172 = por %p170, %p171
      %p174 = scmp.ne.s32.totalorder %s159, %s173
      %p175 = scmp.eq.s32.totalorder %s34, 0
      %p176 = por %p174, %p175
      %s178 = sadd.s32 %s177, 1
      %p181 = scmp.eq.s32.totalorder %s28, 1
      %p182 = scmp.ne.s32.totalorder %s177, %s179
      %p183 = scmp.eq.s32.totalorder %s28, 0
      %p184 = por %p182, %p183
      %p185 = scmp.ne.s32.totalorder %s177, %s179
      %p186 = scmp.eq.s32.totalorder %s33, 1
      %p187 = por %p185, %p186
      %p188 = scmp.ne.s32.totalorder %s179, %s180
      %p189 = scmp.eq.s32.totalorder %s33, 0
      %p190 = por %p188, %p189
      %p191 = scmp.ne.s32.totalorder %s179, %s180
      %p192 = scmp.eq.s32.totalorder %s34, 1
      %p193 = por %p191, %p192
      %p195 = scmp.ne.s32.totalorder %s180, %s194
      %p196 = scmp.eq.s32.totalorder %s34, 0
      %p197 = por %p195, %p196
      %s199 = sadd.s32 %s198, 1
      %p202 = scmp.eq.s32.totalorder %s28, 1
      %p203 = scmp.ne.s32.totalorder %s198, %s200
      %p204 = scmp.eq.s32.totalorder %s28, 0
      %p205 = por %p203, %p204
      %p206 = scmp.ne.s32.totalorder %s198, %s200
      %p207 = scmp.eq.s32.totalorder %s33, 1
      %p208 = por %p206, %p207
      %p209 = scmp.ne.s32.totalorder %s200, %s201
      %p210 = scmp.eq.s32.totalorder %s33, 0
      %p211 = por %p209, %p210
      %p212 = scmp.ne.s32.totalorder %s200, %s201
      %p213 = scmp.eq.s32.totalorder %s34, 1
      %p214 = por %p212, %p213
      %p216 = scmp.ne.s32.totalorder %s201, %s215
      %p217 = scmp.eq.s32.totalorder %s34, 0
      %p218 = por %p216, %p217
      %s220 = sadd.s32 %s219, 1
      %p223 = scmp.eq.s32.totalorder %s28, 1
      %p224 = scmp.ne.s32.totalorder %s219, %s221
      %p225 = scmp.eq.s32.totalorder %s28, 0
      %p226 = por %p224, %p225
      %p227 = scmp.ne.s32.totalorder %s219, %s221
      %p228 = scmp.eq.s32.totalorder %s33, 1
      %p229 = por %p227, %p228
      %p230 = scmp.ne.s32.totalorder %s221, %s222
      %p231 = scmp.eq.s32.totalorder %s33, 0
      %p232 = por %p230, %p231
      %p233 = scmp.ne.s32.totalorder %s221, %s222
      %p234 = scmp.eq.s32.totalorder %s34, 1
      %p235 = por %p233, %p234
      %p237 = scmp.ne.s32.totalorder %s222, %s236
      %p238 = scmp.eq.s32.totalorder %s34, 0
      %p239 = por %p237, %p238
      %s241 = sadd.s32 %s240, 1
      %p244 = scmp.eq.s32.totalorder %s28, 1
      %p245 = scmp.ne.s32.totalorder %s240, %s242
      %p246 = scmp.eq.s32.totalorder %s28, 0
      %p247 = por %p245, %p246
      %p248 = scmp.ne.s32.totalorder %s240, %s242
      %p249 = scmp.eq.s32.totalorder %s33, 1
      %p250 = por %p248, %p249
      %p251 = scmp.ne.s32.totalorder %s242, %s243
      %p252 = scmp.eq.s32.totalorder %s33, 0
      %p253 = por %p251, %p252
      %p254 = scmp.ne.s32.totalorder %s242, %s243
      %p255 = scmp.eq.s32.totalorder %s34, 1
      %p256 = por %p254, %p255
      %p258 = scmp.ne.s32.totalorder %s243, %s257
      %p259 = scmp.eq.s32.totalorder %s34, 0
      %p260 = por %p258, %p259
      %s262 = sadd.s32 %s261, 1
      %p265 = scmp.eq.s32.totalorder %s28, 1
      %p266 = scmp.ne.s32.totalorder %s261, %s263
      %p267 = scmp.eq.s32.totalorder %s28, 0
      %p268 = por %p266, %p267
      %p269 = scmp.ne.s32.totalorder %s261, %s263
      %p270 = scmp.eq.s32.totalorder %s33, 1
      %p271 = por %p269, %p270
      %p272 = scmp.ne.s32.totalorder %s263, %s264
      %p273 = scmp.eq.s32.totalorder %s33, 0
      %p274 = por %p272, %p273
      %p275 = scmp.ne.s32.totalorder %s263, %s264
      %p276 = scmp.eq.s32.totalorder %s34, 1
      %p277 = por %p275, %p276
      %p279 = scmp.ne.s32.totalorder %s264, %s278
      %p280 = scmp.eq.s32.totalorder %s34, 0
      %p281 = por %p279, %p280
      %s282 = ssub.s32 %s28, %s35
      %p283 = scmp.eq.s32.totalorder %s282, 0
      %s285 = sadd.s32 %s284, 1
      %s286 = scalar_select %p283, %s284, %s285
      %p289 = pneg %p283
      %p290 = scmp.eq.s32.totalorder %s28, 1
      %p291 = por %p289, %p290
      %p292 = scmp.ne.s32.totalorder %s284, %s287
      %p293 = scmp.eq.s32.totalorder %s28, 0
      %p294 = por %p292, %p293
      %p295 = scmp.ne.s32.totalorder %s284, %s287
      %p296 = scmp.eq.s32.totalorder %s33, 1
      %p297 = por %p295, %p296
      %p298 = scmp.ne.s32.totalorder %s287, %s288
      %p299 = scmp.eq.s32.totalorder %s33, 0
      %p300 = por %p298, %p299
      %p301 = scmp.ne.s32.totalorder %s287, %s288
      %p302 = scmp.eq.s32.totalorder %s34, 1
      %p303 = por %p301, %p302
      %p305 = scmp.ne.s32.totalorder %s288, %s304
      %p306 = scmp.eq.s32.totalorder %s34, 0
      %p307 = por %p305, %p306
      %p308 = scmp.le.s32.totalorder 1, %s28
      %p309 = scmp.lt.s32.totalorder %s28, 3
      %p310 = pnand %p308, %p309
      %p311 = pneg %p310
      // Predicated region
      $region9: #{tpu_custom_call.1} parent=5 // pred_check
        _
      $region10: #{tpu_custom_call.1} parent=5 // pred_check_branch
        %313 = sbr.rel (%p310) target = $region12
      $region11: #{tpu_custom_call.1} parent=5 // pred_region
        %s314 = ssub.s32 %s28, 1
        // Predicated region
        $region13: #{tpu_custom_call.1} parent=11 // pred_check
          %p315 = pneg %p127
        $region14: #{tpu_custom_call.1} parent=11 // pred_check_branch
          %317 = sbr.rel (%p315) target = $region16
        $region15: #{tpu_custom_call.1} parent=11 // pred_region
          %319 = vsyncadd [#allocation9], 0
          %s320 = sshll.u32 %s3, 4
          %s321 = int_to_ptr.hbm [resolvable:$true] %s320
          %s322 = sshll.u32 [#allocation8], 4
          %s323 = int_to_ptr.vmem [resolvable:$true] %s322
          %328 = dma.hbm_to_vmem [thread:$0]  %s321, 512, %s323, [#allocation9], 128, 128, 8
        $region16: #{tpu_custom_call.1} parent=11 // pred_fallthru
          _
        // Predicated region
        $region17: #{tpu_custom_call.1} parent=11 // pred_check
          %p329 = pneg %p148
        $region18: #{tpu_custom_call.1} parent=11 // pred_check_branch
          %331 = sbr.rel (%p329) target = $region20
        $region19: #{tpu_custom_call.1} parent=11 // pred_region
          _
        $region20: #{tpu_custom_call.1} parent=11 // pred_fallthru
          _
        // Predicated region
        $region21: #{tpu_custom_call.1} parent=11 // pred_check
          %p332 = pneg %p169
        $region22: #{tpu_custom_call.1} parent=11 // pred_check_branch
          %334 = sbr.rel (%p332) target = $region24
        $region23: #{tpu_custom_call.1} parent=11 // pred_region
          %336 = vsyncadd [#allocation9], 0
          %s337 = sshll.u32 %s5, 4
          %s338 = int_to_ptr.hbm [resolvable:$true] %s337
          %s339 = sshll.u32 [#allocation10], 4
          %s340 = int_to_ptr.vmem [resolvable:$true] %s339
          %345 = dma.hbm_to_vmem [thread:$0]  %s338, 512, %s340, [#allocation9], 128, 128, 8
        $region24: #{tpu_custom_call.1} parent=11 // pred_fallthru
          _
        // Predicated region
        $region25: #{tpu_custom_call.1} parent=11 // pred_check
          %p346 = pneg %p190
        $region26: #{tpu_custom_call.1} parent=11 // pred_check_branch
          %348 = sbr.rel (%p346) target = $region28
        $region27: #{tpu_custom_call.1} parent=11 // pred_region
          _
        $region28: #{tpu_custom_call.1} parent=11 // pred_fallthru
          _
        // Predicated region
        $region29: #{tpu_custom_call.1} parent=11 // pred_check
          %p349 = pneg %p211
        $region30: #{tpu_custom_call.1} parent=11 // pred_check_branch
          %351 = sbr.rel (%p349) target = $region32
        $region31: #{tpu_custom_call.1} parent=11 // pred_region
          %353 = vsyncadd [#allocation12], 0
          %s354 = sshll.u32 %s7, 4
          %s355 = int_to_ptr.hbm [resolvable:$true] %s354
          %s356 = sshll.u32 [#allocation11], 4
          %s357 = int_to_ptr.vmem [resolvable:$true] %s356
          %362 = dma.hbm_to_vmem [thread:$0]  %s355, 512, %s357, [#allocation12], 128, 128, 8
        $region32: #{tpu_custom_call.1} parent=11 // pred_fallthru
          _
        // Predicated region
        $region33: #{tpu_custom_call.1} parent=11 // pred_check
          %p363 = pneg %p232
        $region34: #{tpu_custom_call.1} parent=11 // pred_check_branch
          %365 = sbr.rel (%p363) target = $region36
        $region35: #{tpu_custom_call.1} parent=11 // pred_region
          _
        $region36: #{tpu_custom_call.1} parent=11 // pred_fallthru
          _
        // Predicated region
        $region37: #{tpu_custom_call.1} parent=11 // pred_check
          %p366 = pneg %p253
        $region38: #{tpu_custom_call.1} parent=11 // pred_check_branch
          %368 = sbr.rel (%p366) target = $region40
        $region39: #{tpu_custom_call.1} parent=11 // pred_region
          %370 = vsyncadd [#allocation12], 0
          %s371 = sshll.u32 %s9, 4
          %s372 = int_to_ptr.hbm [resolvable:$true] %s371
          %s373 = sshll.u32 [#allocation13], 4
          %s374 = int_to_ptr.vmem [resolvable:$true] %s373
          %379 = dma.hbm_to_vmem [thread:$0]  %s372, 512, %s374, [#allocation12], 128, 128, 8
        $region40: #{tpu_custom_call.1} parent=11 // pred_fallthru
          _
        // Predicated region
        $region41: #{tpu_custom_call.1} parent=11 // pred_check
          %p380 = pneg %p274
        $region42: #{tpu_custom_call.1} parent=11 // pred_check_branch
          %382 = sbr.rel (%p380) target = $region44
        $region43: #{tpu_custom_call.1} parent=11 // pred_region
          _
        $region44: #{tpu_custom_call.1} parent=11 // pred_fallthru
          _
      $region12: #{tpu_custom_call.1} parent=5 // pred_fallthru
        _
      %p383 = scmp.lt.s32.totalorder %s28, 2
      // Predicated region
      $region45: #{tpu_custom_call.1} parent=5 // pred_check
        %p384 = pneg %p383
      $region46: #{tpu_custom_call.1} parent=5 // pred_check_branch
        %386 = sbr.rel (%p384) target = $region48
      $region47: #{tpu_custom_call.1} parent=5 // pred_region
        // Predicated region
        $region49: #{tpu_custom_call.1} parent=47 // pred_check
          %p387 = pneg %p48
        $region50: #{tpu_custom_call.1} parent=47 // pred_check_branch
          %389 = sbr.rel (%p387) target = $region52
        $region51: #{tpu_custom_call.1} parent=47 // pred_region
          %s390 = sand.u32 %s38, 1
          %s391 = scalar_lea.sflag [#allocation3], %s390
          %s392 = sand.u32 %s38, 1
          %s393 = smul.addr %s392, 8
          %s394 = scalar_lea.vmem [#allocation2], %s393
          %396 = vsyncadd %s391, 0
          %s397 = smul.addr %s28, 8
          %s398 = scalar_lea.hbm %s0, %s397
          %s400 = sshll.u32 %s398, 4
          %s401 = int_to_ptr.hbm [resolvable:$true] %s400
          %s402 = sshll.u32 %s394, 4
          %s403 = int_to_ptr.vmem [resolvable:$true] %s402
          %405 = dma.hbm_to_vmem [thread:$0]  %s401, 128, %s403, %s391
        $region52: #{tpu_custom_call.1} parent=47 // pred_fallthru
          _
        // Predicated region
        $region53: #{tpu_custom_call.1} parent=47 // pred_check
          %p406 = pneg %p74
        $region54: #{tpu_custom_call.1} parent=47 // pred_check_branch
          %408 = sbr.rel (%p406) target = $region56
        $region55: #{tpu_custom_call.1} parent=47 // pred_region
          %s409 = sand.u32 %s28, 1
          %s410 = scalar_lea.sflag [#allocation6], %s409
          %s411 = sand.u32 %s64, 1
          %s412 = smul.addr %s411, 8
          %s413 = scalar_lea.vmem [#allocation5], %s412
          %415 = vsyncadd %s410, 0
          %s416 = smul.addr %s28, 8
          %s417 = scalar_lea.hbm %s1, %s416
          %s419 = sshll.u32 %s417, 4
          %s420 = int_to_ptr.hbm [resolvable:$true] %s419
          %s421 = sshll.u32 %s413, 4
          %s422 = int_to_ptr.vmem [resolvable:$true] %s421
          %424 = dma.hbm_to_vmem [thread:$0]  %s420, 128, %s422, %s410
        $region56: #{tpu_custom_call.1} parent=47 // pred_fallthru
          _
        // Predicated region
        $region57: #{tpu_custom_call.1} parent=47 // pred_check
          %p425 = pneg %p100
        $region58: #{tpu_custom_call.1} parent=47 // pred_check_branch
          %427 = sbr.rel (%p425) target = $region60
        $region59: #{tpu_custom_call.1} parent=47 // pred_region
          %s428 = sand.u32 %s28, 1
          %s429 = scalar_lea.sflag [#allocation6], %s428
          %s430 = sand.u32 %s90, 1
          %s431 = smul.addr %s430, 8
          %s432 = scalar_lea.vmem [#allocation7], %s431
          %434 = vsyncadd %s429, 0
          %s435 = smul.addr %s28, 8
          %s436 = scalar_lea.hbm %s2, %s435
          %s438 = sshll.u32 %s436, 4
          %s439 = int_to_ptr.hbm [resolvable:$true] %s438
          %s440 = sshll.u32 %s432, 4
          %s441 = int_to_ptr.vmem [resolvable:$true] %s440
          %443 = dma.hbm_to_vmem [thread:$0]  %s439, 128, %s441, %s429
        $region60: #{tpu_custom_call.1} parent=47 // pred_fallthru
          _
      $region48: #{tpu_custom_call.1} parent=5 // pred_fallthru
        _
      %p444 = scmp.le.s32.totalorder 1, %s28
      %p445 = scmp.lt.s32.totalorder %s28, 3
      %p446 = pnand %p444, %p445
      %p447 = pneg %p446
      // Predicated region
      $region61: #{tpu_custom_call.1} parent=5 // pred_check
        _
      $region62: #{tpu_custom_call.1} parent=5 // pred_check_branch
        %449 = sbr.rel (%p446) target = $region64
      $region63: #{tpu_custom_call.1} parent=5 // pred_region
        %s450 = ssub.s32 %s28, 1
        %s451 = sand.u32 %s41, 1
        %s452 = scalar_lea.sflag [#allocation3], %s451
        %s453 = sand.u32 %s41, 1
        %s454 = smul.addr %s453, 8
        %s455 = scalar_lea.vmem [#allocation2], %s454
        // Predicated region
        $region65: #{tpu_custom_call.1} parent=63 // pred_check
          %p456 = pneg %p54
        $region66: #{tpu_custom_call.1} parent=63 // pred_check_branch
          %458 = sbr.rel (%p456) target = $region68
        $region67: #{tpu_custom_call.1} parent=63 // pred_region
          %460 = dma.done %s452, 128
        $region68: #{tpu_custom_call.1} parent=63 // pred_fallthru
          _
        %s461 = sand.u32 %s33, 1
        %s462 = scalar_lea.sflag [#allocation6], %s461
        %s463 = sand.u32 %s67, 1
        %s464 = smul.addr %s463, 8
        %s465 = scalar_lea.vmem [#allocation5], %s464
        // Predicated region
        $region69: #{tpu_custom_call.1} parent=63 // pred_check
          %p466 = pneg %p80
        $region70: #{tpu_custom_call.1} parent=63 // pred_check_branch
          %468 = sbr.rel (%p466) target = $region72
        $region71: #{tpu_custom_call.1} parent=63 // pred_region
          %470 = dma.done %s462, 128
        $region72: #{tpu_custom_call.1} parent=63 // pred_fallthru
          _
        %s471 = sand.u32 %s33, 1
        %s472 = scalar_lea.sflag [#allocation6], %s471
        %s473 = sand.u32 %s93, 1
        %s474 = smul.addr %s473, 8
        %s475 = scalar_lea.vmem [#allocation7], %s474
        // Predicated region
        $region73: #{tpu_custom_call.1} parent=63 // pred_check
          %p476 = pneg %p106
        $region74: #{tpu_custom_call.1} parent=63 // pred_check_branch
          %478 = sbr.rel (%p476) target = $region76
        $region75: #{tpu_custom_call.1} parent=63 // pred_region
          %480 = dma.done %s472, 128
        $region76: #{tpu_custom_call.1} parent=63 // pred_fallthru
          _
        // Predicated region
        $region77: #{tpu_custom_call.1} parent=63 // pred_check
          %p481 = pneg %p127
        $region78: #{tpu_custom_call.1} parent=63 // pred_check_branch
          %483 = sbr.rel (%p481) target = $region80
        $region79: #{tpu_custom_call.1} parent=63 // pred_region
          %485 = dma.done [#allocation9], 512
        $region80: #{tpu_custom_call.1} parent=63 // pred_fallthru
          _
        // Predicated region
        $region81: #{tpu_custom_call.1} parent=63 // pred_check
          %p486 = pneg %p169
        $region82: #{tpu_custom_call.1} parent=63 // pred_check_branch
          %488 = sbr.rel (%p486) target = $region84
        $region83: #{tpu_custom_call.1} parent=63 // pred_region
          %490 = dma.done [#allocation9], 512
        $region84: #{tpu_custom_call.1} parent=63 // pred_fallthru
          _
        // Predicated region
        $region85: #{tpu_custom_call.1} parent=63 // pred_check
          %p491 = pneg %p211
        $region86: #{tpu_custom_call.1} parent=63 // pred_check_branch
          %493 = sbr.rel (%p491) target = $region88
        $region87: #{tpu_custom_call.1} parent=63 // pred_region
          %495 = dma.done [#allocation12], 512
        $region88: #{tpu_custom_call.1} parent=63 // pred_fallthru
          _
        // Predicated region
        $region89: #{tpu_custom_call.1} parent=63 // pred_check
          %p496 = pneg %p253
        $region90: #{tpu_custom_call.1} parent=63 // pred_check_branch
          %498 = sbr.rel (%p496) target = $region92
        $region91: #{tpu_custom_call.1} parent=63 // pred_region
          %500 = dma.done [#allocation12], 512
        $region92: #{tpu_custom_call.1} parent=63 // pred_fallthru
          _
        %s501 = sand.u32 %s41, 1
        %s502 = scalar_lea.sflag [#allocation3], %s501
        %s503 = sand.u32 %s41, 1
        %s504 = smul.addr %s503, 8
        %s505 = scalar_lea.vmem [#allocation2], %s504
        %p506 = pneg %p54
        %p507 = pneg %p51
        %s508 = sand.u32 %s33, 1
        %s509 = scalar_lea.sflag [#allocation6], %s508
        %s510 = sand.u32 %s67, 1
        %s511 = smul.addr %s510, 8
        %s512 = scalar_lea.vmem [#allocation5], %s511
        %p513 = pneg %p80
        %p514 = pneg %p77
        %s515 = sand.u32 %s33, 1
        %s516 = scalar_lea.sflag [#allocation6], %s515
        %s517 = sand.u32 %s93, 1
        %s518 = smul.addr %s517, 8
        %s519 = scalar_lea.vmem [#allocation7], %s518
        %p520 = pneg %p106
        %p521 = pneg %p103
        %p522 = pneg %p127
        %p523 = pneg %p124
        %p524 = pneg %p148
        %p525 = pneg %p145
        %p526 = pneg %p169
        %p527 = pneg %p166
        %p528 = pneg %p190
        %p529 = pneg %p187
        %p530 = pneg %p211
        %p531 = pneg %p208
        %p532 = pneg %p232
        %p533 = pneg %p229
        %p534 = pneg %p253
        %p535 = pneg %p250
        %p536 = pneg %p274
        %p537 = pneg %p271
        %p538 = pneg %p300
        %p539 = pneg %p297
        %s540 = sand.u32 %s287, 1
        %s541 = scalar_lea.sflag [#allocation4], %s540
        %s542 = sand.u32 %s287, 1
        %s543 = smul.addr %s542, 8
        %s544 = scalar_lea.vmem [#allocation14], %s543
        %v546 = vld [vmem:[%s455] sm:$0xff]
        %v547 = vpack.c.bf16 %v546, %v546
        %v548 = vld [vmem:[%s465] sm:$0xff]
        %v549 = vpack.c.bf16 %v548, %v548
        %v550 = vld [vmem:[%s475] sm:$0xff]
        %v551 = vpack.c.bf16 %v550, %v550
        %v552 = vld [vmem:[#allocation8] sm:$0xff]
        %v553 = vld [vmem:[#allocation8 + $0x8] sm:$0xff]
        %v554 = vld [vmem:[#allocation8 + $0x10] sm:$0xff]
        %v555 = vld [vmem:[#allocation8 + $0x18] sm:$0xff]
        %v556 = vpack.c.bf16 %v553, %v552
        %v557 = vpack.c.bf16 %v555, %v554
        %v558 = vld [vmem:[%s4] sm:$0x1]
        %v560 = vperm.slane %v558, 0
        %vm562 = vcmask 261120
        %v564 = vsel %vm562, %v547, 0
        %566 = vmatpush.bf16.msra.mxu0 0
        %567 = vmatpush.bf16.msra.mxu0 0
        %568 = vmatpush.bf16.msra.mxu0 0
        %569 = vmatpush.bf16.msra.mxu0 0
        %570 = vmatpush.bf16.msra.mxu0 0
        %571 = vmatpush.bf16.msra.mxu0 0
        %572 = vmatpush.bf16.msra.mxu0 %v557
        %573 = vmatpush.bf16.msra.mxu0 %v556
        %574 = vmatmul.bf16.gmra.mxu0 %v564
        %v575 = vpop.f32.mrf.mxu0
        %v576 = vadd.f32 %v560, %v575
        %v577 = vpop.f32.mrf.mxu0
        %578 = vdwg.mxu0
        %v579 = vmul.f32 %v576, 0.35355338
        %v580 = vld [vmem:[#allocation10] sm:$0xff]
        %v581 = vld [vmem:[#allocation10 + $0x8] sm:$0xff]
        %v582 = vld [vmem:[#allocation10 + $0x10] sm:$0xff]
        %v583 = vld [vmem:[#allocation10 + $0x18] sm:$0xff]
        %v584 = vpack.c.bf16 %v581, %v580
        %v585 = vpack.c.bf16 %v583, %v582
        %v586 = vld [vmem:[%s6] sm:$0x1]
        %v588 = vperm.slane %v586, 0
        %v591 = vsel %vm562, %v549, 0
        %593 = vmatpush.bf16.msra.mxu0 0
        %594 = vmatpush.bf16.msra.mxu0 0
        %595 = vmatpush.bf16.msra.mxu0 0
        %596 = vmatpush.bf16.msra.mxu0 0
        %597 = vmatpush.bf16.msra.mxu0 0
        %598 = vmatpush.bf16.msra.mxu0 0
        %599 = vmatpush.bf16.msra.mxu0 %v585
        %600 = vmatpush.bf16.msra.mxu0 %v584
        %601 = vmatmul.bf16.gmra.mxu0 %v591
        %v602 = vpop.f32.mrf.mxu0
        %v603 = vadd.f32 %v588, %v602
        %v604 = vpop.f32.mrf.mxu0
        %605 = vdwg.mxu0
        %v606 = vld [vmem:[#allocation11] sm:$0xff]
        %v607 = vld [vmem:[#allocation11 + $0x8] sm:$0xff]
        %v608 = vld [vmem:[#allocation11 + $0x10] sm:$0xff]
        %v609 = vld [vmem:[#allocation11 + $0x18] sm:$0xff]
        %v610 = vpack.c.bf16 %v607, %v606
        %v611 = vpack.c.bf16 %v609, %v608
        %v612 = vld [vmem:[%s8] sm:$0x1]
        %v614 = vperm.slane %v612, 0
        %v617 = vsel %vm562, %v551, 0
        %619 = vmatpush.bf16.msra.mxu0 0
        %620 = vmatpush.bf16.msra.mxu0 0
        %621 = vmatpush.bf16.msra.mxu0 0
        %622 = vmatpush.bf16.msra.mxu0 0
        %623 = vmatpush.bf16.msra.mxu0 0
        %624 = vmatpush.bf16.msra.mxu0 0
        %625 = vmatpush.bf16.msra.mxu0 %v611
        %626 = vmatpush.bf16.msra.mxu0 %v610
        %627 = vmatmul.bf16.gmra.mxu0 %v617
        %v628 = vpop.f32.mrf.mxu0
        %v629 = vadd.f32 %v614, %v628
        %v630 = vpop.f32.mrf.mxu0
        %631 = vdwg.mxu0
        %v632 = vpack.c.bf16 %v579, %v579
        %v633 = vpack.c.bf16 %v603, %v603
        %v634 = vpack.c.bf16 %v629, %v629
        %vm635 = vcmask 64512
        %v637 = vsel %vm635, %v632, 0
        %v640 = vsel %vm635, %v633, 0
        %642 = vmatpush.bf16.xpose.msra.mxu0 0
        %643 = vmatpush.bf16.xpose.msra.mxu0 0
        %644 = vmatpush.bf16.xpose.msra.mxu0 0
        %645 = vmatpush.bf16.xpose.msra.mxu0 0
        %646 = vmatpush.bf16.xpose.msra.mxu0 0
        %647 = vmatpush.bf16.xpose.msra.mxu0 0
        %648 = vmatpush.bf16.xpose.msra.mxu0 0
        %649 = vmatpush.bf16.xpose.msra.mxu0 %v640
        %650 = vmatmul.bf16.gmra.mxu0 %v637
        %v651 = vpop.f32.mrf.mxu0
        %v652 = vadd.f32 0.0, %v651
        %v653 = vpop.f32.mrf.mxu0
        %654 = vdwg.mxu0
        %v655 = vsel %vm635, %v652, -inf
        %656 = vmax.xlane.f32.xlu0 %v655
        %v657 = vpop.xlane.xlu0 %656
        %v658 = vsub.f32 %v652, %v657
        %v659 = vmul.f32 %v658, 1.442695
        %v660 = vpow.pop %v659
        %v661 = vsel %vm635, %v660, 0.0
        %662 = vadd.xlane.f32.xlu0 %v661
        %v663 = vpop.xlane.xlu0 %662
        %v664 = vrcp.pop %v663
        %v665 = vmul.f32 %v660, %v664
        %v666 = vpack.c.bf16 %v665, %v665
        %v668 = vsel %vm635, %v666, 0
        %vm670 = vcmask 1043456
        %v672 = vsel %vm670, %v634, 0
        %674 = vmatpush.bf16.msra.mxu0 0
        %675 = vmatpush.bf16.msra.mxu0 0
        %676 = vmatpush.bf16.msra.mxu0 0
        %677 = vmatpush.bf16.msra.mxu0 0
        %678 = vmatpush.bf16.msra.mxu0 0
        %679 = vmatpush.bf16.msra.mxu0 0
        %680 = vmatpush.bf16.msra.mxu0 0
        %681 = vmatpush.bf16.msra.mxu0 %v672
        %682 = vmatmul.bf16.gmra.mxu0 %v668
        %v683 = vpop.f32.mrf.mxu0
        %v684 = vadd.f32 0.0, %v683
        %v685 = vpop.f32.mrf.mxu0
        %686 = vdwg.mxu0
        %v688 = vunpack.c.l.b16 %v632
        %v689 = vpack.c.b16 %v688, %v688
        %690 = vrot.lane.b32.xlu0 %v689, 120
        %v691 = vpop.permute.xlu0 %690
        %v693 = vunpack.c.l.b16 %v633
        %v694 = vpack.c.b16 %v693, %v693
        %695 = vrot.lane.b32.xlu0 %v694, 120
        %v696 = vpop.permute.xlu0 %695
        %v698 = vsel %vm635, %v691, 0
        %v701 = vsel %vm635, %v696, 0
        %703 = vmatpush.bf16.xpose.msra.mxu0 0
        %704 = vmatpush.bf16.xpose.msra.mxu0 0
        %705 = vmatpush.bf16.xpose.msra.mxu0 0
        %706 = vmatpush.bf16.xpose.msra.mxu0 0
        %707 = vmatpush.bf16.xpose.msra.mxu0 0
        %708 = vmatpush.bf16.xpose.msra.mxu0 0
        %709 = vmatpush.bf16.xpose.msra.mxu0 0
        %710 = vmatpush.bf16.xpose.msra.mxu0 %v701
        %711 = vmatmul.bf16.gmra.mxu0 %v698
        %v712 = vpop.f32.mrf.mxu0
        %v713 = vadd.f32 0.0, %v712
        %v714 = vpop.f32.mrf.mxu0
        %715 = vdwg.mxu0
        %v716 = vsel %vm635, %v713, -inf
        %717 = vmax.xlane.f32.xlu0 %v716
        %v718 = vpop.xlane.xlu0 %717
        %v719 = vsub.f32 %v713, %v718
        %v720 = vmul.f32 %v719, 1.442695
        %v721 = vpow.pop %v720
        %v722 = vsel %vm635, %v721, 0.0
        %723 = vadd.xlane.f32.xlu0 %v722
        %v724 = vpop.xlane.xlu0 %723
        %v725 = vrcp.pop %v724
        %v726 = vmul.f32 %v721, %v725
        %v727 = vpack.c.bf16 %v726, %v726
        %v729 = vunpack.c.l.b16 %v634
        %v730 = vpack.c.b16 %v729, %v729
        %731 = vrot.lane.b32.xlu0 %v730, 120
        %v732 = vpop.permute.xlu0 %731
        %v734 = vsel %vm635, %v727, 0
        %v737 = vsel %vm670, %v732, 0
        %739 = vmatpush.bf16.msra.mxu0 0
        %740 = vmatpush.bf16.msra.mxu0 0
        %741 = vmatpush.bf16.msra.mxu0 0
        %742 = vmatpush.bf16.msra.mxu0 0
        %743 = vmatpush.bf16.msra.mxu0 0
        %744 = vmatpush.bf16.msra.mxu0 0
        %745 = vmatpush.bf16.msra.mxu0 0
        %746 = vmatpush.bf16.msra.mxu0 %v737
        %747 = vmatmul.bf16.gmra.mxu0 %v734
        %v748 = vpop.f32.mrf.mxu0
        %v749 = vadd.f32 0.0, %v748
        %v750 = vpop.f32.mrf.mxu0
        %751 = vdwg.mxu0
        %752 = vrot.lane.b32.xlu0 %v689, 112
        %v753 = vpop.permute.xlu0 %752
        %754 = vrot.lane.b32.xlu0 %v694, 112
        %v755 = vpop.permute.xlu0 %754
        %v757 = vsel %vm635, %v753, 0
        %v760 = vsel %vm635, %v755, 0
        %762 = vmatpush.bf16.xpose.msra.mxu0 0
        %763 = vmatpush.bf16.xpose.msra.mxu0 0
        %764 = vmatpush.bf16.xpose.msra.mxu0 0
        %765 = vmatpush.bf16.xpose.msra.mxu0 0
        %766 = vmatpush.bf16.xpose.msra.mxu0 0
        %767 = vmatpush.bf16.xpose.msra.mxu0 0
        %768 = vmatpush.bf16.xpose.msra.mxu0 0
        %769 = vmatpush.bf16.xpose.msra.mxu0 %v760
        %770 = vmatmul.bf16.gmra.mxu0 %v757
        %v771 = vpop.f32.mrf.mxu0
        %v772 = vadd.f32 0.0, %v771
        %v773 = vpop.f32.mrf.mxu0
        %774 = vdwg.mxu0
        %v775 = vsel %vm635, %v772, -inf
        %776 = vmax.xlane.f32.xlu0 %v775
        %v777 = vpop.xlane.xlu0 %776
        %v778 = vsub.f32 %v772, %v777
        %v779 = vmul.f32 %v778, 1.442695
        %v780 = vpow.pop %v779
        %v781 = vsel %vm635, %v780, 0.0
        %782 = vadd.xlane.f32.xlu0 %v781
        %v783 = vpop.xlane.xlu0 %782
        %v784 = vrcp.pop %v783
        %v785 = vmul.f32 %v780, %v784
        %v786 = vpack.c.bf16 %v785, %v785
        %787 = vrot.lane.b32.xlu0 %v730, 112
        %v788 = vpop.permute.xlu0 %787
        %v790 = vsel %vm635, %v786, 0
        %v793 = vsel %vm670, %v788, 0
        %795 = vmatpush.bf16.msra.mxu0 0
        %796 = vmatpush.bf16.msra.mxu0 0
        %797 = vmatpush.bf16.msra.mxu0 0
        %798 = vmatpush.bf16.msra.mxu0 0
        %799 = vmatpush.bf16.msra.mxu0 0
        %800 = vmatpush.bf16.msra.mxu0 0
        %801 = vmatpush.bf16.msra.mxu0 0
        %802 = vmatpush.bf16.msra.mxu0 %v793
        %803 = vmatmul.bf16.gmra.mxu0 %v790
        %v804 = vpop.f32.mrf.mxu0
        %v805 = vadd.f32 0.0, %v804
        %v806 = vpop.f32.mrf.mxu0
        %807 = vdwg.mxu0
        %808 = vrot.lane.b32.xlu0 %v689, 104
        %v809 = vpop.permute.xlu0 %808
        %810 = vrot.lane.b32.xlu0 %v694, 104
        %v811 = vpop.permute.xlu0 %810
        %v813 = vsel %vm635, %v809, 0
        %v816 = vsel %vm635, %v811, 0
        %818 = vmatpush.bf16.xpose.msra.mxu0 0
        %819 = vmatpush.bf16.xpose.msra.mxu0 0
        %820 = vmatpush.bf16.xpose.msra.mxu0 0
        %821 = vmatpush.bf16.xpose.msra.mxu0 0
        %822 = vmatpush.bf16.xpose.msra.mxu0 0
        %823 = vmatpush.bf16.xpose.msra.mxu0 0
        %824 = vmatpush.bf16.xpose.msra.mxu0 0
        %825 = vmatpush.bf16.xpose.msra.mxu0 %v816
        %826 = vmatmul.bf16.gmra.mxu0 %v813
        %v827 = vpop.f32.mrf.mxu0
        %v828 = vadd.f32 0.0, %v827
        %v829 = vpop.f32.mrf.mxu0
        %830 = vdwg.mxu0
        %v831 = vsel %vm635, %v828, -inf
        %832 = vmax.xlane.f32.xlu0 %v831
        %v833 = vpop.xlane.xlu0 %832
        %v834 = vsub.f32 %v828, %v833
        %v835 = vmul.f32 %v834, 1.442695
        %v836 = vpow.pop %v835
        %v837 = vsel %vm635, %v836, 0.0
        %838 = vadd.xlane.f32.xlu0 %v837
        %v839 = vpop.xlane.xlu0 %838
        %v840 = vrcp.pop %v839
        %v841 = vmul.f32 %v836, %v840
        %v842 = vpack.c.bf16 %v841, %v841
        %843 = vrot.lane.b32.xlu0 %v730, 104
        %v844 = vpop.permute.xlu0 %843
        %v846 = vsel %vm635, %v842, 0
        %v849 = vsel %vm670, %v844, 0
        %851 = vmatpush.bf16.msra.mxu0 0
        %852 = vmatpush.bf16.msra.mxu0 0
        %853 = vmatpush.bf16.msra.mxu0 0
        %854 = vmatpush.bf16.msra.mxu0 0
        %855 = vmatpush.bf16.msra.mxu0 0
        %856 = vmatpush.bf16.msra.mxu0 0
        %857 = vmatpush.bf16.msra.mxu0 0
        %858 = vmatpush.bf16.msra.mxu0 %v849
        %859 = vmatmul.bf16.gmra.mxu0 %v846
        %v860 = vpop.f32.mrf.mxu0
        %v861 = vadd.f32 0.0, %v860
        %v862 = vpop.f32.mrf.mxu0
        %863 = vdwg.mxu0
        %865 = vrot.lane.b32.xlu0 %v749, 8
        %v866 = vpop.permute.xlu0 %865
        %869 = vrot.lane.b32.xlu0 %v805, 16
        %v870 = vpop.permute.xlu0 %869
        %873 = vrot.lane.b32.xlu0 %v861, 24
        %v874 = vpop.permute.xlu0 %873
        %v876 = vsel %vm635, %v684, %v866
        %vm877 = vcmask 130048
        %v878 = vsel %vm877, %v876, %v870
        %vm879 = vcmask 195584
        %v880 = vsel %vm879, %v878, %v874
        %v881 = vpack.c.bf16 %v880, %v880
        %v882 = vld [vmem:[#allocation13] sm:$0xff]
        %v883 = vld [vmem:[#allocation13 + $0x8] sm:$0xff]
        %v884 = vld [vmem:[#allocation13 + $0x10] sm:$0xff]
        %v885 = vld [vmem:[#allocation13 + $0x18] sm:$0xff]
        %v886 = vpack.c.bf16 %v883, %v882
        %v887 = vpack.c.bf16 %v885, %v884
        %v888 = vld [vmem:[%s10] sm:$0x1]
        %v890 = vperm.slane %v888, 0
        %v893 = vsel %vm562, %v881, 0
        %895 = vmatpush.bf16.msra.mxu0 0
        %896 = vmatpush.bf16.msra.mxu0 0
        %897 = vmatpush.bf16.msra.mxu0 0
        %898 = vmatpush.bf16.msra.mxu0 0
        %899 = vmatpush.bf16.msra.mxu0 0
        %900 = vmatpush.bf16.msra.mxu0 0
        %901 = vmatpush.bf16.msra.mxu0 %v887
        %902 = vmatpush.bf16.msra.mxu0 %v886
        %903 = vmatmul.bf16.gmra.mxu0 %v893
        %v904 = vpop.f32.mrf.mxu0
        %v905 = vadd.f32 %v890, %v904
        %v906 = vpop.f32.mrf.mxu0
        %907 = vdwg.mxu0
        %908 = vst.msk [vmem:[%s544] sm:$0xff] %vm562, %v905
        %s909 = sand.u32 %s287, 1
        %s910 = scalar_lea.sflag [#allocation4], %s909
        %s911 = sand.u32 %s287, 1
        %s912 = smul.addr %s911, 8
        %s913 = scalar_lea.vmem [#allocation14], %s912
        // Predicated region
        $region93: #{tpu_custom_call.1} parent=63 // pred_check
          %p914 = pneg %p297
        $region94: #{tpu_custom_call.1} parent=63 // pred_check_branch
          %916 = sbr.rel (%p914) target = $region96
        $region95: #{tpu_custom_call.1} parent=63 // pred_region
          %918 = vsyncadd %s910, 0
          %s919 = smul.addr %s33, 8
          %s920 = scalar_lea.hbm %s11, %s919
          %s922 = sshll.u32 %s913, 4
          %s923 = int_to_ptr.vmem [resolvable:$true] %s922
          %s924 = sshll.u32 %s920, 4
          %s925 = int_to_ptr.hbm [resolvable:$true] %s924
          %927 = dma.vmem_to_hbm [thread:$0]  %s923, 128, %s925, %s910
        $region96: #{tpu_custom_call.1} parent=63 // pred_fallthru
          _
      $region64: #{tpu_custom_call.1} parent=5 // pred_fallthru
        _
      %p928 = scmp.le.s32.totalorder 2, %s28
      // Predicated region
      $region97: #{tpu_custom_call.1} parent=5 // pred_check
        %p929 = pneg %p928
      $region98: #{tpu_custom_call.1} parent=5 // pred_check_branch
        %931 = sbr.rel (%p929) target = $region100
      $region99: #{tpu_custom_call.1} parent=5 // pred_region
        %s932 = ssub.s32 %s28, 2
        // Predicated region
        $region101: #{tpu_custom_call.1} parent=99 // pred_check
          %p933 = pneg %p303
        $region102: #{tpu_custom_call.1} parent=99 // pred_check_branch
          %935 = sbr.rel (%p933) target = $region104
        $region103: #{tpu_custom_call.1} parent=99 // pred_region
          %s936 = sand.u32 %s288, 1
          %s937 = scalar_lea.sflag [#allocation4], %s936
          %s938 = sand.u32 %s288, 1
          %s939 = smul.addr %s938, 8
          %s940 = scalar_lea.vmem [#allocation14], %s939
          %942 = dma.done %s937, 128
        $region104: #{tpu_custom_call.1} parent=99 // pred_fallthru
          _
      $region100: #{tpu_custom_call.1} parent=5 // pred_fallthru
        _
    $region6: #{tpu_custom_call.1} parent=1 // loop_footer
      %s32 = sadd.s32 1, %s28
    $region7: #{tpu_custom_call.1} parent=1 // loop_footer_branch
      %27 = sbr.rel target = $region3
    $region8: #{tpu_custom_call.1} parent=1 // loop_exit
      _
    %943 = vsyncpa [#allocation3], 1
    %s944 = scalar_lea.sflag [#allocation3], 1
    %945 = vsyncpa %s944, 1
    %946 = vsyncpa [#allocation6], 1
    %s947 = scalar_lea.sflag [#allocation6], 1
    %948 = vsyncpa %s947, 1
    %949 = vsyncpa [#allocation9], 1
    %950 = vsyncpa [#allocation12], 1
    %951 = vsyncpa [#allocation4], 1
    %s952 = scalar_lea.sflag [#allocation4], 1
    %953 = vsyncpa %s952, 1

</llo_original>
